<compile_context>
chip_gen: v6e
topology: v6e:2x2x1
jax: 0.10.0
libtpu: 0.0.40
codegen_flags: <defaults>
</compile_context>

<pallas_src>
import math
import functools

import jax
import jax.numpy as jnp
from jax import lax
from jax.experimental import pallas as pl
from jax.experimental.pallas import tpu as pltpu

MXU_DTYPE = jnp.bfloat16   # MXU operand dtype; accumulation stays float32
LN_EPS = 1e-5
NEG_INF = -1e30            # f32-safe mask value (bf16 never sees it)
VMEM_LIMIT = 48 * 1024 * 1024   # explicit scoped-VMEM budget (safe on v5e/v6e/v7x)


def _cparams(*sems):
    return pltpu.CompilerParams(dimension_semantics=sems,
                                vmem_limit_bytes=VMEM_LIMIT)


def _tile(dim, preferred, granule=128):
    """Largest tile <= preferred that divides dim and is a multiple of `granule`
    (falls back to the largest plain divisor; never returns a block bigger than
    `preferred` for dims > preferred, so a weird vocab can't blow up VMEM)."""
    if dim <= preferred:
        return dim
    t = preferred
    while t >= granule:
        if dim % t == 0 and t % granule == 0:
            return t
        t -= granule
    for t in range(preferred, 0, -1):
        if dim % t == 0:
            return t
    return dim   # TODO(synk): pad + mask instead of falling back for prime dims


def _layernorm(x, g, b):
    x = x.astype(jnp.float32)
    mean = jnp.mean(x, axis=-1, keepdims=True)
    var = jnp.mean(jnp.square(x - mean), axis=-1, keepdims=True)
    return (x - mean) * lax.rsqrt(var + LN_EPS) * g + b


# --------------------- fused LayerNorm + QKV projections ---------------------

def _ln_qkv_kernel(x_ref, g_ref, b_ref,
                   wq_ref, bq_ref, wk_ref, bk_ref, wv_ref, bv_ref,
                   q_ref, k_ref, v_ref, xn_ref):
    # LayerNorm hoisted out of the column axis: computed once per row block.
    @pl.when(pl.program_id(1) == 0)
    def _ln():
        xn_ref[...] = _layernorm(x_ref[...], g_ref[...],
                                 b_ref[...]).astype(xn_ref.dtype)

    xn = xn_ref[...]                                          # bf16 (tm, D)
    for w_ref, bias_ref, o_ref in ((wq_ref, bq_ref, q_ref),
                                   (wk_ref, bk_ref, k_ref),
                                   (wv_ref, bv_ref, v_ref)):
        o_ref[...] = (jnp.dot(xn, w_ref[...],
                              preferred_element_type=jnp.float32)
                      + bias_ref[...]).astype(o_ref.dtype)


def ln_qkv(x, g, b, wq, bq, wk, bk, wv, bv, *, tm=256, tn=256):
    """x: (M, D) f32 residual stream; weights bf16.  Returns bf16 Q, K, V."""
    M, D = x.shape
    tm = _tile(M, tm, granule=8)
    tn = _tile(D, tn)
    grid = (M // tm, D // tn)
    row_spec = pl.BlockSpec((tm, D), lambda i, j: (i, 0))
    par_spec = pl.BlockSpec((1, D), lambda i, j: (0, 0))
    w_spec = pl.BlockSpec((D, tn), lambda i, j: (0, j))
    bias_spec = pl.BlockSpec((1, tn), lambda i, j: (0, j))
    out_spec = pl.BlockSpec((tm, tn), lambda i, j: (i, j))
    out_shape = jax.ShapeDtypeStruct((M, D), MXU_DTYPE)
    return pl.pallas_call(
        _ln_qkv_kernel,
        grid=grid,
        in_specs=[row_spec, par_spec, par_spec,
                  w_spec, bias_spec, w_spec, bias_spec, w_spec, bias_spec],
        out_specs=[out_spec, out_spec, out_spec],
        out_shape=[out_shape, out_shape, out_shape],
        scratch_shapes=[pltpu.VMEM((tm, D), MXU_DTYPE)],      # LN'd activations
        compiler_params=_cparams("parallel", "arbitrary"),
    )(x, g.reshape(1, -1), b.reshape(1, -1),
      wq, bq.reshape(1, -1), wk, bk.reshape(1, -1), wv, bv.reshape(1, -1))


# ------------------- flash-style blocked causal attention --------------------

def _flash_attn_kernel(q_ref, k_ref, v_ref, o_ref, m_ref, l_ref, acc_ref,
                       *, heads, head_dim, tq, tk, scale):
    qi = pl.program_id(1)
    ki = pl.program_id(2)
    n_kv = pl.num_programs(2)

    @pl.when(ki == 0)
    def _init():
        m_ref[...] = jnp.full_like(m_ref, NEG_INF)
        l_ref[...] = jnp.zeros_like(l_ref)
        acc_ref[...] = jnp.zeros_like(acc_ref)

    # Skip kv blocks that lie entirely above the causal diagonal.  The kv
    # index_map also clamps these block indices, so no DMA is issued either.
    @pl.when(ki * tk < (qi + 1) * tq)
    def _compute():
        row = qi * tq + lax.broadcasted_iota(jnp.int32, (tq, tk), 0)
        col = ki * tk + lax.broadcasted_iota(jnp.int32, (tq, tk), 1)
        causal = col <= row
        # TODO(synk): repack Q/K/V as (B*H, S, head_dim) and move heads to a
        # grid axis once head_dim is lane-aligned; per-head column slices below
        # are sub-128-lane when head_dim < 128.
        for h in range(heads):
            sl = slice(h * head_dim, (h + 1) * head_dim)
            qh = q_ref[:, sl]                                  # bf16
            kh = k_ref[:, sl]
            vh = v_ref[:, sl]
            s = lax.dot_general(qh, kh, (((1,), (1,)), ((), ())),
                                preferred_element_type=jnp.float32) * scale
            s = jnp.where(causal, s, NEG_INF)
            m_prev = m_ref[:, h:h + 1]
            l_prev = l_ref[:, h:h + 1]
            m_new = jnp.maximum(m_prev, jnp.max(s, axis=-1, keepdims=True))
            alpha = jnp.exp(m_prev - m_new)
            p = jnp.exp(s - m_new)
            l_ref[:, h:h + 1] = alpha * l_prev + jnp.sum(p, axis=-1, keepdims=True)
            acc_ref[:, sl] = (alpha * acc_ref[:, sl]
                              + jnp.dot(p.astype(MXU_DTYPE), vh,
                                        preferred_element_type=jnp.float32))
            m_ref[:, h:h + 1] = m_new

    @pl.when(ki == n_kv - 1)
    def _flush():
        inv = pl.reciprocal(l_ref[...], approx=False)          # exact, (tq, heads)
        for h in range(heads):
            sl = slice(h * head_dim, (h + 1) * head_dim)
            o_ref[:, sl] = (acc_ref[:, sl] * inv[:, h:h + 1]).astype(o_ref.dtype)


def causal_attention(q, k, v, *, batch, seq, heads, tq=256, tk=256):
    """q, k, v: (batch*seq, d_model) bf16 batch-major.  Returns bf16 output."""
    M, D = q.shape
    head_dim = D // heads
    tq = _tile(seq, tq, granule=8)
    tk = _tile(seq, tk, granule=8)
    n_q = seq // tq
    n_kv = seq // tk
    scale = 1.0 / math.sqrt(head_dim)
    kern = functools.partial(_flash_attn_kernel, heads=heads, head_dim=head_dim,
                             tq=tq, tk=tk, scale=scale)

    def kv_index(b, i, j):
        # Clamp fully-masked kv blocks to the last valid one: the block index
        # does not change, so the pipeline issues no new DMA for skipped blocks.
        last_valid = ((i + 1) * tq - 1) // tk
        return (b * n_kv + jnp.minimum(j, last_valid), 0)

    q_spec = pl.BlockSpec((tq, D), lambda b, i, j: (b * n_q + i, 0))
    kv_spec = pl.BlockSpec((tk, D), kv_index)
    out_spec = pl.BlockSpec((tq, D), lambda b, i, j: (b * n_q + i, 0))
    return pl.pallas_call(
        kern,
        grid=(batch, n_q, n_kv),
        in_specs=[q_spec, kv_spec, kv_spec],
        out_specs=out_spec,
        out_shape=jax.ShapeDtypeStruct((M, D), MXU_DTYPE),
        scratch_shapes=[pltpu.VMEM((tq, heads), jnp.float32),   # running max
                        pltpu.VMEM((tq, heads), jnp.float32),   # running denom
                        pltpu.VMEM((tq, D), jnp.float32)],      # output accumulator
        compiler_params=_cparams("parallel", "parallel", "arbitrary"),
    )(q, k, v)


# ------------- tiled matmul (K accumulation) + bias + residual ---------------

def _matmul_resid_kernel(x_ref, w_ref, b_ref, r_ref, o_ref, acc_ref):
    kk = pl.program_id(2)

    @pl.when(kk == 0)
    def _init():
        acc_ref[...] = jnp.zeros_like(acc_ref)

    acc_ref[...] += jnp.dot(x_ref[...].astype(MXU_DTYPE), w_ref[...],
                            preferred_element_type=jnp.float32)

    @pl.when(kk == pl.num_programs(2) - 1)
    def _flush():
        o_ref[...] = (acc_ref[...] + b_ref[...]
                      + r_ref[...].astype(jnp.float32)).astype(o_ref.dtype)


def linear_bias_residual(x, w, b, resid, *, tm=256, tn=256, tk=512):
    """x bf16, w bf16, resid f32 residual stream -> f32 output."""
    M, K = x.shape
    N = w.shape[1]
    tm = _tile(M, tm, granule=8)
    tn = _tile(N, tn)
    tk = _tile(K, tk)
    grid = (M // tm, N // tn, K // tk)
    return pl.pallas_call(
        _matmul_resid_kernel,
        grid=grid,
        in_specs=[pl.BlockSpec((tm, tk), lambda i, j, k: (i, k)),
                  pl.BlockSpec((tk, tn), lambda i, j, k: (k, j)),
                  pl.BlockSpec((1, tn), lambda i, j, k: (0, j)),
                  pl.BlockSpec((tm, tn), lambda i, j, k: (i, j))],
        out_specs=pl.BlockSpec((tm, tn), lambda i, j, k: (i, j)),
        out_shape=jax.ShapeDtypeStruct((M, N), resid.dtype),
        scratch_shapes=[pltpu.VMEM((tm, tn), jnp.float32)],
        compiler_params=_cparams("parallel", "parallel", "arbitrary"),
    )(x, w, b.reshape(1, -1), resid)


# --------- fused FFN sublayer: LN + W1 + ReLU + W2 + bias + residual ---------

def _ffn_kernel(x_ref, g_ref, b_ref, w1_ref, b1_ref, w2_ref, b2_ref,
                o_ref, xn_ref, acc_ref):
    f = pl.program_id(1)

    @pl.when(f == 0)
    def _init():
        xn_ref[...] = _layernorm(x_ref[...], g_ref[...],
                                 b_ref[...]).astype(xn_ref.dtype)
        acc_ref[...] = jnp.zeros_like(acc_ref)

    h = (jnp.dot(xn_ref[...], w1_ref[...],
                 preferred_element_type=jnp.float32) + b1_ref[...])
    h = jnp.maximum(h, 0.0)
    acc_ref[...] += jnp.dot(h.astype(MXU_DTYPE), w2_ref[...],
                            preferred_element_type=jnp.float32)

    @pl.when(f == pl.num_programs(1) - 1)
    def _flush():
        o_ref[...] = (acc_ref[...] + b2_ref[...]
                      + x_ref[...].astype(jnp.float32)).astype(o_ref.dtype)


def ffn_block(x, g, b, w1, b1, w2, b2, *, tm=256, tf=256):
    M, D = x.shape
    F = w1.shape[1]
    tm = _tile(M, tm, granule=8)
    tf = _tile(F, tf)
    grid = (M // tm, F // tf)
    return pl.pallas_call(
        _ffn_kernel,
        grid=grid,
        in_specs=[pl.BlockSpec((tm, D), lambda i, f: (i, 0)),
                  pl.BlockSpec((1, D), lambda i, f: (0, 0)),
                  pl.BlockSpec((1, D), lambda i, f: (0, 0)),
                  pl.BlockSpec((D, tf), lambda i, f: (0, f)),
                  pl.BlockSpec((1, tf), lambda i, f: (0, f)),
                  pl.BlockSpec((tf, D), lambda i, f: (f, 0)),
                  pl.BlockSpec((1, D), lambda i, f: (0, 0))],
        out_specs=pl.BlockSpec((tm, D), lambda i, f: (i, 0)),
        out_shape=jax.ShapeDtypeStruct((M, D), x.dtype),
        scratch_shapes=[pltpu.VMEM((tm, D), MXU_DTYPE),       # LN'd input (bf16)
                        pltpu.VMEM((tm, D), jnp.float32)],    # accumulator
        compiler_params=_cparams("parallel", "arbitrary"),
    )(x, g.reshape(1, -1), b.reshape(1, -1), w1, b1.reshape(1, -1),
      w2, b2.reshape(1, -1))


# ---- generator: final LN + vocab-tiled logits + online LSE, single kernel ---
# Grid = (row blocks, phase, vocab tiles).  Phase 0 accumulates the online
# log-sum-exp; phase 1 recomputes each logits tile and writes log-probs once.
# No (M, V) f32 logits ever round-trips through HBM.

def _generator_kernel(x_ref, g_ref, b_ref, w_ref, bias_ref,
                      out_ref, xn_ref, m_ref, l_ref):
    ph = pl.program_id(1)
    v = pl.program_id(2)

    @pl.when((ph == 0) & (v == 0))
    def _init():
        xn_ref[...] = _layernorm(x_ref[...], g_ref[...],
                                 b_ref[...]).astype(xn_ref.dtype)
        m_ref[...] = jnp.full_like(m_ref, NEG_INF)
        l_ref[...] = jnp.zeros_like(l_ref)

    logits = (jnp.dot(xn_ref[...], w_ref[...],
                      preferred_element_type=jnp.float32) + bias_ref[...])

    @pl.when(ph == 0)
    def _accumulate():
        m_prev = m_ref[...]
        m_new = jnp.maximum(m_prev, jnp.max(logits, axis=-1, keepdims=True))
        l_ref[...] = (jnp.exp(m_prev - m_new) * l_ref[...]
                      + jnp.sum(jnp.exp(logits - m_new), axis=-1, keepdims=True))
        m_ref[...] = m_new

    @pl.when(ph == 1)
    def _write():
        lse = m_ref[...] + jnp.log(l_ref[...])
        out_ref[...] = (logits - lse).astype(out_ref.dtype)


def generator(x, g, b, w, bias, *, tm=256, tv=512):
    M, D = x.shape
    V = w.shape[1]
    tm = _tile(M, tm, granule=8)
    tv = _tile(V, tv)
    grid = (M // tm, 2, V // tv)
    return pl.pallas_call(
        _generator_kernel,
        grid=grid,
        in_specs=[pl.BlockSpec((tm, D), lambda i, p, j: (i, 0)),
                  pl.BlockSpec((1, D), lambda i, p, j: (0, 0)),
                  pl.BlockSpec((1, D), lambda i, p, j: (0, 0)),
                  pl.BlockSpec((D, tv), lambda i, p, j: (0, j)),
                  pl.BlockSpec((1, tv), lambda i, p, j: (0, j))],
        # During phase 0 the output block index stays pinned at (i, 0) so no
        # garbage writebacks occur; phase 1 writes every (i, j) block exactly once.
        out_specs=pl.BlockSpec((tm, tv), lambda i, p, j: (i, p * j)),
        out_shape=jax.ShapeDtypeStruct((M, V), jnp.float32),
        scratch_shapes=[pltpu.VMEM((tm, D), MXU_DTYPE),       # LN'd input (bf16)
                        pltpu.VMEM((tm, 1), jnp.float32),     # running max
                        pltpu.VMEM((tm, 1), jnp.float32)],    # running sum-exp
        compiler_params=_cparams("parallel", "arbitrary", "arbitrary"),
    )(x, g.reshape(1, -1), b.reshape(1, -1), w, bias.reshape(1, -1))


# --------------------------- Parameter setup --------------------------------

def positional_encoding(max_len, d_model):
    pos = jnp.arange(max_len, dtype=jnp.float32)[:, None]
    div = jnp.exp(jnp.arange(0, d_model, 2, dtype=jnp.float32)
                  * (-math.log(10000.0) / d_model))
    pe = jnp.zeros((max_len, d_model), jnp.float32)
    pe = pe.at[:, 0::2].set(jnp.sin(pos * div))
    pe = pe.at[:, 1::2].set(jnp.cos(pos * div))
    return pe


def init_params(key, *, vocab, d_model, d_ff, n_heads, n_layers, max_len=256):
    # Weight matrices stored in bf16 (MXU operand dtype) -> half the HBM/DMA
    # traffic when weights are re-streamed per M-tile.  Biases / LN params f32.
    def dense(k, fan_in, fan_out):
        w = 0.02 * jax.random.normal(k, (fan_in, fan_out), jnp.float32)
        return w.astype(MXU_DTYPE)

    keys = iter(jax.random.split(key, 8 * n_layers + 4))
    layers = []
    for _ in range(n_layers):
        layers.append(dict(
            ln1_g=jnp.ones((d_model,), jnp.float32),
            ln1_b=jnp.zeros((d_model,), jnp.float32),
            wq=dense(next(keys), d_model, d_model), bq=jnp.zeros((d_model,)),
            wk=dense(next(keys), d_model, d_model), bk=jnp.zeros((d_model,)),
            wv=dense(next(keys), d_model, d_model), bv=jnp.zeros((d_model,)),
            wo=dense(next(keys), d_model, d_model), bo=jnp.zeros((d_model,)),
            ln2_g=jnp.ones((d_model,), jnp.float32),
            ln2_b=jnp.zeros((d_model,), jnp.float32),
            w1=dense(next(keys), d_model, d_ff), b1=jnp.zeros((d_ff,)),
            w2=dense(next(keys), d_ff, d_model), b2=jnp.zeros((d_model,)),
        ))
    params = dict(
        embed=0.02 * jax.random.normal(next(keys), (vocab, d_model), jnp.float32),
        pe=positional_encoding(max_len, d_model),
        layers=layers,
        lnf_g=jnp.ones((d_model,), jnp.float32),
        lnf_b=jnp.zeros((d_model,), jnp.float32),
        gen_w=dense(next(keys), d_model, vocab),
        gen_b=jnp.zeros((vocab,), jnp.float32),
        n_heads=n_heads,
    )
    return params


# --------------------------- GPT forward -------------------------------------

def gpt_forward(params, x_tokens):
    """x_tokens: (seq, batch) int32 -> (seq, batch, vocab) log-probs."""
    S, B = x_tokens.shape
    D = params["embed"].shape[1]
    H = params["n_heads"]

    # src_embed: token embedding * sqrt(d_model) + positional encoding.
    # TODO(synk): embedding gather + the final (B,S,V)->(S,B,V) transpose remain
    # XLA ops (data-dependent gather has no clean BlockSpec form); dropout is
    # eval-mode identity and omitted.
    tok = x_tokens.T                                         # (B, S) batch-major
    x = params["embed"][tok] * math.sqrt(D) + params["pe"][:S][None, :, :]
    x = x.reshape(B * S, D).astype(jnp.float32)              # (B*S, D) residual, f32

    for layer in params["layers"]:
        # sublayer 1: x + Wo @ attn(LN(x))   (causal mask); Q/K/V + attn are bf16
        q, k, v = ln_qkv(x, layer["ln1_g"], layer["ln1_b"],
                         layer["wq"], layer["bq"], layer["wk"], layer["bk"],
                         layer["wv"], layer["bv"])
        attn = causal_attention(q, k, v, batch=B, seq=S, heads=H)
        x = linear_bias_residual(attn, layer["wo"], layer["bo"], x)
        # sublayer 2: x + FFN(LN(x))  (fully fused)
        x = ffn_block(x, layer["ln2_g"], layer["ln2_b"],
                      layer["w1"], layer["b1"], layer["w2"], layer["b2"])

    # final LayerNorm + generator (Linear + log_softmax), vocab-tiled, one pass
    out = generator(x, params["lnf_g"], params["lnf_b"],
                    params["gen_w"], params["gen_b"])
    V = out.shape[-1]
    return out.reshape(B, S, V).transpose(1, 0, 2)           # (S, B, V)


# --------------------------- main --------------------------------------------

if __name__ == "__main__":
    SEQ, BATCH = 8, 2
    VOCAB, D_MODEL, D_FF, N_HEADS, N_LAYERS = 64, 32, 64, 4, 2

    key = jax.random.PRNGKey(0)
    k_tok, k_par = jax.random.split(key)
    x = jax.random.randint(k_tok, (SEQ, BATCH), 0, VOCAB, dtype=jnp.int32)
    params = init_params(k_par, vocab=VOCAB, d_model=D_MODEL, d_ff=D_FF,
                         n_heads=N_HEADS, n_layers=N_LAYERS)

    out = gpt_forward(params, x)
    out = jax.block_until_ready(out)

    assert out.shape == (SEQ, BATCH, VOCAB)
    # log_softmax sanity: rows should exponentiate-sum to ~1
    assert bool(jnp.allclose(jnp.exp(out).sum(-1), 1.0, atol=1e-3))
    print("KERNEL_OK")
</pallas_src>

<mosaic_0001>
module attributes {stable_mosaic.version = 11 : i64} {
  func.func @_ln_qkv_kernel(%arg0: i32, %arg1: i32, %arg2: memref<16x32xf32, #tpu.memory_space<vmem>>, %arg3: memref<1x32xf32, #tpu.memory_space<vmem>>, %arg4: memref<1x32xf32, #tpu.memory_space<vmem>>, %arg5: memref<32x32xbf16, #tpu.memory_space<vmem>>, %arg6: memref<1x32xf32, #tpu.memory_space<vmem>>, %arg7: memref<32x32xbf16, #tpu.memory_space<vmem>>, %arg8: memref<1x32xf32, #tpu.memory_space<vmem>>, %arg9: memref<32x32xbf16, #tpu.memory_space<vmem>>, %arg10: memref<1x32xf32, #tpu.memory_space<vmem>>, %arg11: memref<16x32xbf16, #tpu.memory_space<vmem>>, %arg12: memref<16x32xbf16, #tpu.memory_space<vmem>>, %arg13: memref<16x32xbf16, #tpu.memory_space<vmem>>, %arg14: memref<16x32xbf16, #tpu.memory_space<vmem>>) attributes {dimension_semantics = [#tpu.dimension_semantics<parallel>, #tpu.dimension_semantics<arbitrary>], iteration_bounds = array<i64: 1, 1>, scalar_prefetch = 0 : i64, scratch_operands = 1 : i64, tpu.core_type = #tpu.core_type<tc>, window_params = [{transform_indices = @transform_0, window_bounds = array<i64: 16, 32>}, {pipeline_mode = #tpu.pipeline_mode<synchronous>, transform_indices = @transform_1, window_bounds = array<i64: 1, 32>}, {pipeline_mode = #tpu.pipeline_mode<synchronous>, transform_indices = @transform_2, window_bounds = array<i64: 1, 32>}, {transform_indices = @transform_3, window_bounds = array<i64: 32, 32>}, {transform_indices = @transform_4, window_bounds = array<i64: 1, 32>}, {transform_indices = @transform_5, window_bounds = array<i64: 32, 32>}, {transform_indices = @transform_6, window_bounds = array<i64: 1, 32>}, {transform_indices = @transform_7, window_bounds = array<i64: 32, 32>}, {transform_indices = @transform_8, window_bounds = array<i64: 1, 32>}, {transform_indices = @transform_9, window_bounds = array<i64: 16, 32>}, {transform_indices = @transform_10, window_bounds = array<i64: 16, 32>}, {transform_indices = @transform_11, window_bounds = array<i64: 16, 32>}]} {
    %c0_i32 = arith.constant 0 : i32
    %0 = arith.cmpi eq, %arg1, %c0_i32 : i32
    %1 = arith.extui %0 : i1 to i32
    %c0_i32_0 = arith.constant 0 : i32
    %2 = arith.cmpi ne, %1, %c0_i32_0 : i32
    scf.if %2 {
      %c0_22 = arith.constant 0 : index
      %c0_23 = arith.constant 0 : index
      %25 = vector.load %arg2[%c0_22, %c0_23] : memref<16x32xf32, #tpu.memory_space<vmem>>, vector<16x32xf32>
      %c0_24 = arith.constant 0 : index
      %c0_25 = arith.constant 0 : index
      %26 = vector.load %arg3[%c0_24, %c0_25] : memref<1x32xf32, #tpu.memory_space<vmem>>, vector<1x32xf32>
      %c0_26 = arith.constant 0 : index
      %c0_27 = arith.constant 0 : index
      %27 = vector.load %arg4[%c0_26, %c0_27] : memref<1x32xf32, #tpu.memory_space<vmem>>, vector<1x32xf32>
      %cst_28 = arith.constant dense<0.000000e+00> : vector<16xf32>
      %28 = vector.multi_reduction <add>, %25, %cst_28 [1] : vector<16x32xf32> to vector<16xf32>
      %29 = vector.shape_cast %28 : vector<16xf32> to vector<16x1xf32>
      %cst_29 = arith.constant 3.200000e+01 : f32
      %30 = vector.broadcast %cst_29 : f32 to vector<16x1xf32>
      %31 = arith.divf %29, %30 : vector<16x1xf32>
      %32 = vector.broadcast %31 : vector<16x1xf32> to vector<16x32xf32>
      %33 = arith.subf %25, %32 : vector<16x32xf32>
      %34 = arith.mulf %33, %33 : vector<16x32xf32>
      %cst_30 = arith.constant dense<0.000000e+00> : vector<16xf32>
      %35 = vector.multi_reduction <add>, %34, %cst_30 [1] : vector<16x32xf32> to vector<16xf32>
      %36 = vector.shape_cast %35 : vector<16xf32> to vector<16x1xf32>
      %cst_31 = arith.constant 3.200000e+01 : f32
      %37 = vector.broadcast %cst_31 : f32 to vector<16x1xf32>
      %38 = arith.divf %36, %37 : vector<16x1xf32>
      %39 = vector.broadcast %31 : vector<16x1xf32> to vector<16x32xf32>
      %40 = arith.subf %25, %39 : vector<16x32xf32>
      %cst_32 = arith.constant 9.99999974E-6 : f32
      %41 = vector.broadcast %cst_32 : f32 to vector<16x1xf32>
      %42 = arith.addf %38, %41 : vector<16x1xf32>
      %43 = math.rsqrt %42 : vector<16x1xf32>
      %44 = vector.broadcast %43 : vector<16x1xf32> to vector<16x32xf32>
      %45 = arith.mulf %40, %44 : vector<16x32xf32>
      %46 = vector.broadcast %26 : vector<1x32xf32> to vector<16x32xf32>
      %47 = arith.mulf %45, %46 : vector<16x32xf32>
      %48 = vector.broadcast %27 : vector<1x32xf32> to vector<16x32xf32>
      %49 = arith.addf %47, %48 : vector<16x32xf32>
      %50 = arith.truncf %49 : vector<16x32xf32> to vector<16x32xbf16>
      %c0_33 = arith.constant 0 : index
      %c0_34 = arith.constant 0 : index
      %51 = vector.load %arg14[%c0_33, %c0_34] : memref<16x32xbf16, #tpu.memory_space<vmem>>, vector<16x32xbf16>
      tpu.vector_store %arg14[%c0_33, %c0_34], %50 {strides = array<i32>} : memref<16x32xbf16, #tpu.memory_space<vmem>>, vector<16x32xbf16>,
    } else {
    }
    %c0 = arith.constant 0 : index
    %c0_1 = arith.constant 0 : index
    %3 = vector.load %arg14[%c0, %c0_1] : memref<16x32xbf16, #tpu.memory_space<vmem>>, vector<16x32xbf16>
    %c0_2 = arith.constant 0 : index
    %c0_3 = arith.constant 0 : index
    %4 = vector.load %arg5[%c0_2, %c0_3] : memref<32x32xbf16, #tpu.memory_space<vmem>>, vector<32x32xbf16>
    %cst = arith.constant dense<0.000000e+00> : vector<16x32xf32>
    %5 = tpu.matmul %3, %4, %cst {dimension_numbers = #tpu.dot_dimension_numbers<[1], [0], [0], [1], [0, 0, 1, 1], [], []>} : vector<16x32xbf16>, vector<32x32xbf16>, vector<16x32xf32> -> vector<16x32xf32>
    %c0_4 = arith.constant 0 : index
    %c0_5 = arith.constant 0 : index
    %6 = vector.load %arg6[%c0_4, %c0_5] : memref<1x32xf32, #tpu.memory_space<vmem>>, vector<1x32xf32>
    %7 = vector.broadcast %6 : vector<1x32xf32> to vector<16x32xf32>
    %8 = arith.addf %5, %7 : vector<16x32xf32>
    %9 = arith.truncf %8 : vector<16x32xf32> to vector<16x32xbf16>
    %c0_6 = arith.constant 0 : index
    %c0_7 = arith.constant 0 : index
    %10 = vector.load %arg11[%c0_6, %c0_7] : memref<16x32xbf16, #tpu.memory_space<vmem>>, vector<16x32xbf16>
    tpu.vector_store %arg11[%c0_6, %c0_7], %9 {strides = array<i32>} : memref<16x32xbf16, #tpu.memory_space<vmem>>, vector<16x32xbf16>,
    %c0_8 = arith.constant 0 : index
    %c0_9 = arith.constant 0 : index
    %11 = vector.load %arg7[%c0_8, %c0_9] : memref<32x32xbf16, #tpu.memory_space<vmem>>, vector<32x32xbf16>
    %cst_10 = arith.constant dense<0.000000e+00> : vector<16x32xf32>
    %12 = tpu.matmul %3, %11, %cst_10 {dimension_numbers = #tpu.dot_dimension_numbers<[1], [0], [0], [1], [0, 0, 1, 1], [], []>} : vector<16x32xbf16>, vector<32x32xbf16>, vector<16x32xf32> -> vector<16x32xf32>
    %c0_11 = arith.constant 0 : index
    %c0_12 = arith.constant 0 : index
    %13 = vector.load %arg8[%c0_11, %c0_12] : memref<1x32xf32, #tpu.memory_space<vmem>>, vector<1x32xf32>
    %14 = vector.broadcast %13 : vector<1x32xf32> to vector<16x32xf32>
    %15 = arith.addf %12, %14 : vector<16x32xf32>
    %16 = arith.truncf %15 : vector<16x32xf32> to vector<16x32xbf16>
    %c0_13 = arith.constant 0 : index
    %c0_14 = arith.constant 0 : index
    %17 = vector.load %arg12[%c0_13, %c0_14] : memref<16x32xbf16, #tpu.memory_space<vmem>>, vector<16x32xbf16>
    tpu.vector_store %arg12[%c0_13, %c0_14], %16 {strides = array<i32>} : memref<16x32xbf16, #tpu.memory_space<vmem>>, vector<16x32xbf16>,
    %c0_15 = arith.constant 0 : index
    %c0_16 = arith.constant 0 : index
    %18 = vector.load %arg9[%c0_15, %c0_16] : memref<32x32xbf16, #tpu.memory_space<vmem>>, vector<32x32xbf16>
    %cst_17 = arith.constant dense<0.000000e+00> : vector<16x32xf32>
    %19 = tpu.matmul %3, %18, %cst_17 {dimension_numbers = #tpu.dot_dimension_numbers<[1], [0], [0], [1], [0, 0, 1, 1], [], []>} : vector<16x32xbf16>, vector<32x32xbf16>, vector<16x32xf32> -> vector<16x32xf32>
    %c0_18 = arith.constant 0 : index
    %c0_19 = arith.constant 0 : index
    %20 = vector.load %arg10[%c0_18, %c0_19] : memref<1x32xf32, #tpu.memory_space<vmem>>, vector<1x32xf32>
    %21 = vector.broadcast %20 : vector<1x32xf32> to vector<16x32xf32>
    %22 = arith.addf %19, %21 : vector<16x32xf32>
    %23 = arith.truncf %22 : vector<16x32xf32> to vector<16x32xbf16>
    %c0_20 = arith.constant 0 : index
    %c0_21 = arith.constant 0 : index
    %24 = vector.load %arg13[%c0_20, %c0_21] : memref<16x32xbf16, #tpu.memory_space<vmem>>, vector<16x32xbf16>
    tpu.vector_store %arg13[%c0_20, %c0_21], %23 {strides = array<i32>} : memref<16x32xbf16, #tpu.memory_space<vmem>>, vector<16x32xbf16>,
    return
  }
  func.func @transform_0(%arg0: i32, %arg1: i32) -> (i32, i32) {
    %c0_i32 = arith.constant 0 : i32
    %c0_i32_0 = arith.constant 0 : i32
    return %arg0, %c0_i32 : i32, i32
  }
  func.func @transform_1(%arg0: i32, %arg1: i32) -> (i32, i32) {
    %c0_i32 = arith.constant 0 : i32
    %c0_i32_0 = arith.constant 0 : i32
    %c0_i32_1 = arith.constant 0 : i32
    return %c0_i32, %c0_i32_0 : i32, i32
  }
  func.func @transform_2(%arg0: i32, %arg1: i32) -> (i32, i32) {
    %c0_i32 = arith.constant 0 : i32
    %c0_i32_0 = arith.constant 0 : i32
    %c0_i32_1 = arith.constant 0 : i32
    return %c0_i32, %c0_i32_0 : i32, i32
  }
  func.func @transform_3(%arg0: i32, %arg1: i32) -> (i32, i32) {
    %c0_i32 = arith.constant 0 : i32
    %c0_i32_0 = arith.constant 0 : i32
    return %c0_i32, %arg1 : i32, i32
  }
  func.func @transform_4(%arg0: i32, %arg1: i32) -> (i32, i32) {
    %c0_i32 = arith.constant 0 : i32
    %c0_i32_0 = arith.constant 0 : i32
    return %c0_i32, %arg1 : i32, i32
  }
  func.func @transform_5(%arg0: i32, %arg1: i32) -> (i32, i32) {
    %c0_i32 = arith.constant 0 : i32
    %c0_i32_0 = arith.constant 0 : i32
    return %c0_i32, %arg1 : i32, i32
  }
  func.func @transform_6(%arg0: i32, %arg1: i32) -> (i32, i32) {
    %c0_i32 = arith.constant 0 : i32
    %c0_i32_0 = arith.constant 0 : i32
    return %c0_i32, %arg1 : i32, i32
  }
  func.func @transform_7(%arg0: i32, %arg1: i32) -> (i32, i32) {
    %c0_i32 = arith.constant 0 : i32
    %c0_i32_0 = arith.constant 0 : i32
    return %c0_i32, %arg1 : i32, i32
  }
  func.func @transform_8(%arg0: i32, %arg1: i32) -> (i32, i32) {
    %c0_i32 = arith.constant 0 : i32
    %c0_i32_0 = arith.constant 0 : i32
    return %c0_i32, %arg1 : i32, i32
  }
  func.func @transform_9(%arg0: i32, %arg1: i32) -> (i32, i32) {
    %c0_i32 = arith.constant 0 : i32
    return %arg0, %arg1 : i32, i32
  }
  func.func @transform_10(%arg0: i32, %arg1: i32) -> (i32, i32) {
    %c0_i32 = arith.constant 0 : i32
    return %arg0, %arg1 : i32, i32
  }
  func.func @transform_11(%arg0: i32, %arg1: i32) -> (i32, i32) {
    %c0_i32 = arith.constant 0 : i32
    return %arg0, %arg1 : i32, i32
  }
}

</mosaic_0001>

<llo_original>
// kernel: tpu_custom_call.1
$region0: #{tpu_custom_call.1}
  #allocation0 [shape = 'u32[]', space=smem, size = 0x4, offset = 0x4, fixed_abs, tag = 'smem constant byte address 0x4 - core index']
  #allocation1 [shape = 'u32[144,128]{1,0:T(1,128)}', space=vmem, size = 0x12000, scoped, tag = 'internal scratch']
  #allocation2 [shape = 'bf16[16,32]{1,0:T(8,128)(2,1)}', space=vmem, size = 0x1000, scoped, tag = 'scratch operand']
  %s0 = inlined_call_operand.hbm [shape: f32[16,32], index: 0, kind: input, shape index: {}]
  %s1 = inlined_call_operand.vmem [shape: f32[1,32], index: 1, kind: input, shape index: {}]
  %s2 = inlined_call_operand.vmem [shape: f32[1,32], index: 2, kind: input, shape index: {}]
  %s3 = inlined_call_operand.hbm [shape: bf16[32,32], index: 3, kind: input, shape index: {}]
  %s4 = inlined_call_operand.vmem [shape: f32[1,32], index: 4, kind: input, shape index: {}]
  %s5 = inlined_call_operand.hbm [shape: bf16[32,32], index: 5, kind: input, shape index: {}]
  %s6 = inlined_call_operand.vmem [shape: f32[1,32], index: 6, kind: input, shape index: {}]
  %s7 = inlined_call_operand.hbm [shape: bf16[32,32], index: 7, kind: input, shape index: {}]
  %s8 = inlined_call_operand.vmem [shape: f32[1,32], index: 8, kind: input, shape index: {}]
  %s9 = inlined_call_operand.hbm [shape: bf16[16,32], index: 9, kind: output, shape index: {0}]
  %s10 = inlined_call_operand.hbm [shape: bf16[16,32], index: 10, kind: output, shape index: {1}]
  %s11 = inlined_call_operand.hbm [shape: bf16[16,32], index: 11, kind: output, shape index: {2}]
  %12 = xla_tuple %s9, %s10, %s11
  %s13 = sld [smem:[#allocation0]]
  $region82: #{tpu_custom_call.1} parent=0
    _
  %s15 = ssub.s32 1, %s13
  %s16 = scalar_select 0, %s15, %s13
  $region1: #{tpu_custom_call.1} parent=0
    #allocation3 [shape = 'u8[8192]{0}', space=vmem, size = 0x2000, scoped, tag = 'input window, operand 0, single buffered']
    #allocation4 [shape = 's32[1]{0}', space=sflag, size = 0x4, scoped, tag = 'scoped memory for tpu_custom_call.1']
    #allocation5 [shape = 's32[1]{0}', space=sflag, size = 0x4, scoped, tag = 'scoped memory for tpu_custom_call.1']
    #allocation6 [shape = 'u8[8192]{0}', space=vmem, size = 0x2000, scoped, tag = 'input window, operand 3, single buffered']
    #allocation7 [shape = 's32[1]{0}', space=sflag, size = 0x4, scoped, tag = 'scoped memory for tpu_custom_call.1']
    #allocation8 [shape = 'u8[8192]{0}', space=vmem, size = 0x2000, scoped, tag = 'input window, operand 5, single buffered']
    #allocation9 [shape = 'u8[8192]{0}', space=vmem, size = 0x2000, scoped, tag = 'input window, operand 7, single buffered']
    #allocation10 [shape = 's32[1]{0}', space=sflag, size = 0x4, scoped, tag = 'scoped memory for tpu_custom_call.1']
    #allocation11 [shape = 'u8[4096]{0}', space=vmem, size = 0x1000, scoped, tag = 'output window, operand 0, single buffered']
    #allocation12 [shape = 'u8[4096]{0}', space=vmem, size = 0x1000, scoped, tag = 'output window, operand 1, single buffered']
    #allocation13 [shape = 's32[1]{0}', space=sflag, size = 0x4, scoped, tag = 'scoped memory for tpu_custom_call.1']
    #allocation14 [shape = 'u8[4096]{0}', space=vmem, size = 0x1000, scoped, tag = 'output window, operand 2, single buffered']
    %17 = vsyncpa [#allocation4], 0
    %18 = vsyncpa [#allocation7], 0
    %19 = vsyncpa [#allocation10], 0
    %20 = vsyncpa [#allocation5], 0
    %21 = vsyncpa [#allocation13], 0
    // Predicated region
    $region2: #{tpu_custom_call.1} parent=1 // pred_check
      _
    $region3: #{tpu_custom_call.1} parent=1 // pred_check_branch
      %23 = sbr.rel (0) target = $region5
    $region4: #{tpu_custom_call.1} parent=1 // pred_region
      %s25 = ssub.s32 256, 256
      %26 = vsyncadd [#allocation4], %s25
      %s27 = sshll.u32 [#allocation3], 4
      %s28 = int_to_ptr.vmem [resolvable:$true] %s27
      %33 = dma.hbm_to_vmem [thread:$0]  %s0, 256, %s28, [#allocation4], 128, 128, 8
    $region5: #{tpu_custom_call.1} parent=1 // pred_fallthru
      _
    // Predicated region
    $region6: #{tpu_custom_call.1} parent=1 // pred_check
      _
    $region7: #{tpu_custom_call.1} parent=1 // pred_check_branch
      %35 = sbr.rel (0) target = $region9
    $region8: #{tpu_custom_call.1} parent=1 // pred_region
      _
    $region9: #{tpu_custom_call.1} parent=1 // pred_fallthru
      _
    // Predicated region
    $region10: #{tpu_custom_call.1} parent=1 // pred_check
      _
    $region11: #{tpu_custom_call.1} parent=1 // pred_check_branch
      %37 = sbr.rel (0) target = $region13
    $region12: #{tpu_custom_call.1} parent=1 // pred_region
      _
    $region13: #{tpu_custom_call.1} parent=1 // pred_fallthru
      _
    // Predicated region
    $region14: #{tpu_custom_call.1} parent=1 // pred_check
      _
    $region15: #{tpu_custom_call.1} parent=1 // pred_check_branch
      %39 = sbr.rel (0) target = $region17
    $region16: #{tpu_custom_call.1} parent=1 // pred_region
      %s41 = ssub.s32 256, 256
      %42 = vsyncadd [#allocation7], %s41
      %s43 = sshll.u32 [#allocation6], 4
      %s44 = int_to_ptr.vmem [resolvable:$true] %s43
      %49 = dma.hbm_to_vmem [thread:$0]  %s3, 256, %s44, [#allocation7], 64, 64, 4
    $region17: #{tpu_custom_call.1} parent=1 // pred_fallthru
      _
    // Predicated region
    $region18: #{tpu_custom_call.1} parent=1 // pred_check
      _
    $region19: #{tpu_custom_call.1} parent=1 // pred_check_branch
      %51 = sbr.rel (0) target = $region21
    $region20: #{tpu_custom_call.1} parent=1 // pred_region
      _
    $region21: #{tpu_custom_call.1} parent=1 // pred_fallthru
      _
    // Predicated region
    $region22: #{tpu_custom_call.1} parent=1 // pred_check
      _
    $region23: #{tpu_custom_call.1} parent=1 // pred_check_branch
      %53 = sbr.rel (0) target = $region25
    $region24: #{tpu_custom_call.1} parent=1 // pred_region
      %s55 = ssub.s32 256, 256
      %56 = vsyncadd [#allocation7], %s55
      %s57 = sshll.u32 [#allocation8], 4
      %s58 = int_to_ptr.vmem [resolvable:$true] %s57
      %63 = dma.hbm_to_vmem [thread:$0]  %s5, 256, %s58, [#allocation7], 64, 64, 4
    $region25: #{tpu_custom_call.1} parent=1 // pred_fallthru
      _
    // Predicated region
    $region26: #{tpu_custom_call.1} parent=1 // pred_check
      _
    $region27: #{tpu_custom_call.1} parent=1 // pred_check_branch
      %65 = sbr.rel (0) target = $region29
    $region28: #{tpu_custom_call.1} parent=1 // pred_region
      _
    $region29: #{tpu_custom_call.1} parent=1 // pred_fallthru
      _
    // Predicated region
    $region30: #{tpu_custom_call.1} parent=1 // pred_check
      _
    $region31: #{tpu_custom_call.1} parent=1 // pred_check_branch
      %67 = sbr.rel (0) target = $region33
    $region32: #{tpu_custom_call.1} parent=1 // pred_region
      %s69 = ssub.s32 256, 256
      %70 = vsyncadd [#allocation10], %s69
      %s71 = sshll.u32 [#allocation9], 4
      %s72 = int_to_ptr.vmem [resolvable:$true] %s71
      %77 = dma.hbm_to_vmem [thread:$0]  %s7, 256, %s72, [#allocation10], 64, 64, 4
    $region33: #{tpu_custom_call.1} parent=1 // pred_fallthru
      _
    // Predicated region
    $region34: #{tpu_custom_call.1} parent=1 // pred_check
      _
    $region35: #{tpu_custom_call.1} parent=1 // pred_check_branch
      %79 = sbr.rel (0) target = $region37
    $region36: #{tpu_custom_call.1} parent=1 // pred_region
      _
    $region37: #{tpu_custom_call.1} parent=1 // pred_fallthru
      _
    // Predicated region
    $region38: #{tpu_custom_call.1} parent=1 // pred_check
      _
    $region39: #{tpu_custom_call.1} parent=1 // pred_check_branch
      %81 = sbr.rel (0) target = $region41
    $region40: #{tpu_custom_call.1} parent=1 // pred_region
      %82 = dma.done [#allocation4], 256
    $region41: #{tpu_custom_call.1} parent=1 // pred_fallthru
      _
    // Predicated region
    $region42: #{tpu_custom_call.1} parent=1 // pred_check
      _
    $region43: #{tpu_custom_call.1} parent=1 // pred_check_branch
      %84 = sbr.rel (0) target = $region45
    $region44: #{tpu_custom_call.1} parent=1 // pred_region
      %85 = dma.done [#allocation7], 256
    $region45: #{tpu_custom_call.1} parent=1 // pred_fallthru
      _
    // Predicated region
    $region46: #{tpu_custom_call.1} parent=1 // pred_check
      _
    $region47: #{tpu_custom_call.1} parent=1 // pred_check_branch
      %87 = sbr.rel (0) target = $region49
    $region48: #{tpu_custom_call.1} parent=1 // pred_region
      %88 = dma.done [#allocation7], 256
    $region49: #{tpu_custom_call.1} parent=1 // pred_fallthru
      _
    // Predicated region
    $region50: #{tpu_custom_call.1} parent=1 // pred_check
      _
    $region51: #{tpu_custom_call.1} parent=1 // pred_check_branch
      %90 = sbr.rel (0) target = $region53
    $region52: #{tpu_custom_call.1} parent=1 // pred_region
      %91 = dma.done [#allocation10], 256
    $region53: #{tpu_custom_call.1} parent=1 // pred_fallthru
      _
    %p93 = scmp.eq.s32.totalorder 0, 0
    // Predicated region
    $region54: #{tpu_custom_call.1} parent=1 // pred_check
      %p94 = pneg %p93
    $region55: #{tpu_custom_call.1} parent=1 // pred_check_branch
      %96 = sbr.rel (%p94) target = $region57
    $region56: #{tpu_custom_call.1} parent=1 // pred_region
      %v97 = vld [vmem:[#allocation3] sm:$0xff]
      %v98 = vld [vmem:[#allocation3 + $0x8] sm:$0xff]
      %v99 = vld [vmem:[%s1] sm:$0x1]
      %v100 = vld [vmem:[%s2] sm:$0x1]
      %vm101 = vcmask 261120
      %v102 = vsel %vm101, %v97, 0.0
      %103 = vadd.xlane.f32.xlu0 %v102
      %v104 = vpop.xlane.xlu0 %103
      %v105 = vsel %vm101, %v98, 0.0
      %106 = vadd.xlane.f32.xlu0 %v105
      %v107 = vpop.xlane.xlu0 %106
      %v108 = vrcp.pop 32.0
      %v109 = vmul.f32 %v104, %v108
      %v110 = vmul.f32 %v107, %v108
      %v111 = vsub.f32 %v97, %v109
      %v112 = vsub.f32 %v98, %v110
      %v113 = vmul.f32 %v111, %v111
      %v114 = vmul.f32 %v112, %v112
      %v115 = vsel %vm101, %v113, 0.0
      %116 = vadd.xlane.f32.xlu0 %v115
      %v117 = vpop.xlane.xlu0 %116
      %v118 = vsel %vm101, %v114, 0.0
      %119 = vadd.xlane.f32.xlu0 %v118
      %v120 = vpop.xlane.xlu0 %119
      %v121 = vmul.f32 %v117, %v108
      %v122 = vmul.f32 %v120, %v108
      %v123 = vadd.f32 %v121, 1e-05
      %v124 = vadd.f32 %v122, 1e-05
      %v125 = vrsqrt.pop %v123
      %v126 = vrsqrt.pop %v124
      %v127 = vmul.f32 %v111, %v125
      %v128 = vmul.f32 %v112, %v126
      %v130 = vlaneseq
      %v131 = vshrl.u32 %v130, 7
      %v132 = vsub.s32 0, %v131
      %v133 = vrot.slane %v99, %v132
      %v135 = vmul.f32 %v127, %v133
      %v136 = vmul.f32 %v128, %v133
      %v138 = vlaneseq
      %v139 = vshrl.u32 %v138, 7
      %v140 = vsub.s32 0, %v139
      %v141 = vrot.slane %v100, %v140
      %v143 = vadd.f32 %v135, %v141
      %v144 = vadd.f32 %v136, %v141
      %v145 = vpack.c.bf16 %v144, %v143
      %v147 = vunpack.c.l.b16 %v145
      %v148 = vunpack.c.h.b16 %v145
      %v149 = vpack.c.b16 %v147, %v147
      %v150 = vpack.c.b16 %v148, %v148
      %vm153 = vcmask 257024
      %154 = vst.msk [vmem:[#allocation2] sm:$0xf] %vm153, %v149
      %155 = vst.msk [vmem:[#allocation2 + $0x4] sm:$0xf] %vm153, %v150
    $region57: #{tpu_custom_call.1} parent=1 // pred_fallthru
      _
    %v156 = vld [vmem:[#allocation2] sm:$0xf]
    %v157 = vld [vmem:[#allocation2 + $0x4] sm:$0xf]
    %v158 = vld [vmem:[#allocation6] sm:$0xf]
    %v159 = vld [vmem:[#allocation6 + $0x4] sm:$0xf]
    %v160 = vld [vmem:[#allocation6 + $0x8] sm:$0xf]
    %v161 = vld [vmem:[#allocation6 + $0xc] sm:$0xf]
    %v162 = vld [vmem:[%s4] sm:$0x1]
    %v164 = vlaneseq
    %v165 = vshrl.u32 %v164, 7
    %v166 = vsub.s32 0, %v165
    %v167 = vrot.slane %v162, %v166
    %v171 = vunpack.c.l.b16 %v156
    %v172 = vunpack.c.l.b16 %v157
    %v173 = vpack.c.b16 %v172, %v171
    %v178 = vunpack.c.l.b16 %v158
    %v179 = vunpack.c.l.b16 %v159
    %v180 = vunpack.c.l.b16 %v160
    %v181 = vunpack.c.l.b16 %v161
    %v182 = vpack.c.b16 %v179, %v178
    %v183 = vpack.c.b16 %v181, %v180
    %vm186 = vcmask 261120
    %v188 = vsel %vm186, %v173, 0
    %190 = vmatprep.subr.bf16.mxu0 0
    %191 = vmatpush1.bf16.msra.mxu0 0
    %192 = vmatprep.subr.bf16.mxu0 0
    %193 = vmatpush1.bf16.msra.mxu0 0
    %194 = vmatprep.subr.bf16.mxu0 0
    %195 = vmatpush1.bf16.msra.mxu0 0
    %196 = vmatprep.subr.bf16.mxu0 0
    %197 = vmatpush1.bf16.msra.mxu0 0
    %198 = vmatprep.subr.bf16.mxu0 0
    %199 = vmatpush1.bf16.msra.mxu0 0
    %200 = vmatprep.subr.bf16.mxu0 0
    %201 = vmatpush1.bf16.msra.mxu0 0
    %202 = vmatprep.subr.bf16.mxu0 0
    %203 = vmatpush1.bf16.msra.mxu0 %v183
    %204 = vmatprep.subr.bf16.mxu0 0
    %205 = vmatpush1.bf16.msra.mxu0 %v182
    %206 = vmatprep.subr.bf16.mxu0 0
    %207 = vmatpush2.bf16.msra.mxu0 0
    %208 = vmatprep.subr.bf16.mxu0 0
    %209 = vmatpush2.bf16.msra.mxu0 0
    %210 = vmatprep.subr.bf16.mxu0 0
    %211 = vmatpush2.bf16.msra.mxu0 0
    %212 = vmatprep.subr.bf16.mxu0 0
    %213 = vmatpush2.bf16.msra.mxu0 0
    %214 = vmatprep.subr.bf16.mxu0 0
    %215 = vmatpush2.bf16.msra.mxu0 0
    %216 = vmatprep.subr.bf16.mxu0 0
    %217 = vmatpush2.bf16.msra.mxu0 0
    %218 = vmatprep.subr.bf16.mxu0 0
    %219 = vmatpush2.bf16.msra.mxu0 0
    %220 = vmatprep.subr.bf16.mxu0 0
    %221 = vmatpush2.bf16.msra.mxu0 0
    %222 = vmatprep.mubr.bf16.mxu0 0
    %223 = vmatmul.mubr.bf16.gmra.mxu0 %v188
    %v224 = vpop.f32.mrf.mxu0
    %v225 = vadd.f32 %v167, %v224
    %v226 = vpop.f32.mrf.mxu0
    %v227 = vpop.f32.mrf.mxu0
    %v228 = vadd.f32 %v167, %v227
    %v229 = vpop.f32.mrf.mxu0
    %230 = vdwg.mxu0
    %v231 = vpack.c.bf16 %v228, %v225
    %v233 = vunpack.c.l.b16 %v231
    %v234 = vunpack.c.h.b16 %v231
    %v235 = vpack.c.b16 %v233, %v233
    %v236 = vpack.c.b16 %v234, %v234
    %vm239 = vcmask 257024
    %240 = vst.msk [vmem:[#allocation11] sm:$0xf] %vm239, %v235
    %241 = vst.msk [vmem:[#allocation11 + $0x4] sm:$0xf] %vm239, %v236
    %v242 = vld [vmem:[#allocation8] sm:$0xf]
    %v243 = vld [vmem:[#allocation8 + $0x4] sm:$0xf]
    %v244 = vld [vmem:[#allocation8 + $0x8] sm:$0xf]
    %v245 = vld [vmem:[#allocation8 + $0xc] sm:$0xf]
    %v246 = vld [vmem:[%s6] sm:$0x1]
    %v248 = vlaneseq
    %v249 = vshrl.u32 %v248, 7
    %v250 = vsub.s32 0, %v249
    %v251 = vrot.slane %v246, %v250
    %v257 = vunpack.c.l.b16 %v242
    %v258 = vunpack.c.l.b16 %v243
    %v259 = vunpack.c.l.b16 %v244
    %v260 = vunpack.c.l.b16 %v245
    %v261 = vpack.c.b16 %v258, %v257
    %v262 = vpack.c.b16 %v260, %v259
    %265 = vmatprep.subr.bf16.mxu0 0
    %266 = vmatpush1.bf16.msra.mxu0 0
    %267 = vmatprep.subr.bf16.mxu0 0
    %268 = vmatpush1.bf16.msra.mxu0 0
    %269 = vmatprep.subr.bf16.mxu0 0
    %270 = vmatpush1.bf16.msra.mxu0 0
    %271 = vmatprep.subr.bf16.mxu0 0
    %272 = vmatpush1.bf16.msra.mxu0 0
    %273 = vmatprep.subr.bf16.mxu0 0
    %274 = vmatpush1.bf16.msra.mxu0 0
    %275 = vmatprep.subr.bf16.mxu0 0
    %276 = vmatpush1.bf16.msra.mxu0 0
    %277 = vmatprep.subr.bf16.mxu0 0
    %278 = vmatpush1.bf16.msra.mxu0 %v262
    %279 = vmatprep.subr.bf16.mxu0 0
    %280 = vmatpush1.bf16.msra.mxu0 %v261
    %281 = vmatprep.subr.bf16.mxu0 0
    %282 = vmatpush2.bf16.msra.mxu0 0
    %283 = vmatprep.subr.bf16.mxu0 0
    %284 = vmatpush2.bf16.msra.mxu0 0
    %285 = vmatprep.subr.bf16.mxu0 0
    %286 = vmatpush2.bf16.msra.mxu0 0
    %287 = vmatprep.subr.bf16.mxu0 0
    %288 = vmatpush2.bf16.msra.mxu0 0
    %289 = vmatprep.subr.bf16.mxu0 0
    %290 = vmatpush2.bf16.msra.mxu0 0
    %291 = vmatprep.subr.bf16.mxu0 0
    %292 = vmatpush2.bf16.msra.mxu0 0
    %293 = vmatprep.subr.bf16.mxu0 0
    %294 = vmatpush2.bf16.msra.mxu0 0
    %295 = vmatprep.subr.bf16.mxu0 0
    %296 = vmatpush2.bf16.msra.mxu0 0
    %297 = vmatprep.mubr.bf16.mxu0 0
    %298 = vmatmul.mubr.bf16.gmra.mxu0 %v188
    %v299 = vpop.f32.mrf.mxu0
    %v300 = vadd.f32 %v251, %v299
    %v301 = vpop.f32.mrf.mxu0
    %v302 = vpop.f32.mrf.mxu0
    %v303 = vadd.f32 %v251, %v302
    %v304 = vpop.f32.mrf.mxu0
    %305 = vdwg.mxu0
    %v306 = vpack.c.bf16 %v303, %v300
    %v308 = vunpack.c.l.b16 %v306
    %v309 = vunpack.c.h.b16 %v306
    %v310 = vpack.c.b16 %v308, %v308
    %v311 = vpack.c.b16 %v309, %v309
    %314 = vst.msk [vmem:[#allocation12] sm:$0xf] %vm239, %v310
    %315 = vst.msk [vmem:[#allocation12 + $0x4] sm:$0xf] %vm239, %v311
    %v316 = vld [vmem:[#allocation9] sm:$0xf]
    %v317 = vld [vmem:[#allocation9 + $0x4] sm:$0xf]
    %v318 = vld [vmem:[#allocation9 + $0x8] sm:$0xf]
    %v319 = vld [vmem:[#allocation9 + $0xc] sm:$0xf]
    %v320 = vld [vmem:[%s8] sm:$0x1]
    %v322 = vlaneseq
    %v323 = vshrl.u32 %v322, 7
    %v324 = vsub.s32 0, %v323
    %v325 = vrot.slane %v320, %v324
    %v331 = vunpack.c.l.b16 %v316
    %v332 = vunpack.c.l.b16 %v317
    %v333 = vunpack.c.l.b16 %v318
    %v334 = vunpack.c.l.b16 %v319
    %v335 = vpack.c.b16 %v332, %v331
    %v336 = vpack.c.b16 %v334, %v333
    %339 = vmatprep.subr.bf16.mxu0 0
    %340 = vmatpush1.bf16.msra.mxu0 0
    %341 = vmatprep.subr.bf16.mxu0 0
    %342 = vmatpush1.bf16.msra.mxu0 0
    %343 = vmatprep.subr.bf16.mxu0 0
    %344 = vmatpush1.bf16.msra.mxu0 0
    %345 = vmatprep.subr.bf16.mxu0 0
    %346 = vmatpush1.bf16.msra.mxu0 0
    %347 = vmatprep.subr.bf16.mxu0 0
    %348 = vmatpush1.bf16.msra.mxu0 0
    %349 = vmatprep.subr.bf16.mxu0 0
    %350 = vmatpush1.bf16.msra.mxu0 0
    %351 = vmatprep.subr.bf16.mxu0 0
    %352 = vmatpush1.bf16.msra.mxu0 %v336
    %353 = vmatprep.subr.bf16.mxu0 0
    %354 = vmatpush1.bf16.msra.mxu0 %v335
    %355 = vmatprep.subr.bf16.mxu0 0
    %356 = vmatpush2.bf16.msra.mxu0 0
    %357 = vmatprep.subr.bf16.mxu0 0
    %358 = vmatpush2.bf16.msra.mxu0 0
    %359 = vmatprep.subr.bf16.mxu0 0
    %360 = vmatpush2.bf16.msra.mxu0 0
    %361 = vmatprep.subr.bf16.mxu0 0
    %362 = vmatpush2.bf16.msra.mxu0 0
    %363 = vmatprep.subr.bf16.mxu0 0
    %364 = vmatpush2.bf16.msra.mxu0 0
    %365 = vmatprep.subr.bf16.mxu0 0
    %366 = vmatpush2.bf16.msra.mxu0 0
    %367 = vmatprep.subr.bf16.mxu0 0
    %368 = vmatpush2.bf16.msra.mxu0 0
    %369 = vmatprep.subr.bf16.mxu0 0
    %370 = vmatpush2.bf16.msra.mxu0 0
    %371 = vmatprep.mubr.bf16.mxu0 0
    %372 = vmatmul.mubr.bf16.gmra.mxu0 %v188
    %v373 = vpop.f32.mrf.mxu0
    %v374 = vadd.f32 %v325, %v373
    %v375 = vpop.f32.mrf.mxu0
    %v376 = vpop.f32.mrf.mxu0
    %v377 = vadd.f32 %v325, %v376
    %v378 = vpop.f32.mrf.mxu0
    %379 = vdwg.mxu0
    %v380 = vpack.c.bf16 %v377, %v374
    %v382 = vunpack.c.l.b16 %v380
    %v383 = vunpack.c.h.b16 %v380
    %v384 = vpack.c.b16 %v382, %v382
    %v385 = vpack.c.b16 %v383, %v383
    %388 = vst.msk [vmem:[#allocation14] sm:$0xf] %vm239, %v384
    %389 = vst.msk [vmem:[#allocation14 + $0x4] sm:$0xf] %vm239, %v385
    // Predicated region
    $region58: #{tpu_custom_call.1} parent=1 // pred_check
      _
    $region59: #{tpu_custom_call.1} parent=1 // pred_check_branch
      %391 = sbr.rel (0) target = $region61
    $region60: #{tpu_custom_call.1} parent=1 // pred_region
      %s393 = ssub.s32 128, 128
      %394 = vsyncadd [#allocation5], %s393
      %s395 = sshll.u32 [#allocation11], 4
      %s396 = int_to_ptr.vmem [resolvable:$true] %s395
      %401 = dma.vmem_to_hbm [thread:$0]  %s396, 128, %s9, [#allocation5], 64, 64, 4
    $region61: #{tpu_custom_call.1} parent=1 // pred_fallthru
      _
    // Predicated region
    $region62: #{tpu_custom_call.1} parent=1 // pred_check
      _
    $region63: #{tpu_custom_call.1} parent=1 // pred_check_branch
      %403 = sbr.rel (0) target = $region65
    $region64: #{tpu_custom_call.1} parent=1 // pred_region
      %s405 = ssub.s32 128, 128
      %406 = vsyncadd [#allocation13], %s405
      %s407 = sshll.u32 [#allocation12], 4
      %s408 = int_to_ptr.vmem [resolvable:$true] %s407
      %413 = dma.vmem_to_hbm [thread:$0]  %s408, 128, %s10, [#allocation13], 64, 64, 4
    $region65: #{tpu_custom_call.1} parent=1 // pred_fallthru
      _
    // Predicated region
    $region66: #{tpu_custom_call.1} parent=1 // pred_check
      _
    $region67: #{tpu_custom_call.1} parent=1 // pred_check_branch
      %415 = sbr.rel (0) target = $region69
    $region68: #{tpu_custom_call.1} parent=1 // pred_region
      %s417 = ssub.s32 128, 128
      %418 = vsyncadd [#allocation13], %s417
      %s419 = sshll.u32 [#allocation14], 4
      %s420 = int_to_ptr.vmem [resolvable:$true] %s419
      %425 = dma.vmem_to_hbm [thread:$0]  %s420, 128, %s11, [#allocation13], 64, 64, 4
    $region69: #{tpu_custom_call.1} parent=1 // pred_fallthru
      _
    // Predicated region
    $region70: #{tpu_custom_call.1} parent=1 // pred_check
      _
    $region71: #{tpu_custom_call.1} parent=1 // pred_check_branch
      %427 = sbr.rel (0) target = $region73
    $region72: #{tpu_custom_call.1} parent=1 // pred_region
      %428 = dma.done [#allocation5], 128
    $region73: #{tpu_custom_call.1} parent=1 // pred_fallthru
      _
    // Predicated region
    $region74: #{tpu_custom_call.1} parent=1 // pred_check
      _
    $region75: #{tpu_custom_call.1} parent=1 // pred_check_branch
      %430 = sbr.rel (0) target = $region77
    $region76: #{tpu_custom_call.1} parent=1 // pred_region
      %431 = dma.done [#allocation13], 128
    $region77: #{tpu_custom_call.1} parent=1 // pred_fallthru
      _
    // Predicated region
    $region78: #{tpu_custom_call.1} parent=1 // pred_check
      _
    $region79: #{tpu_custom_call.1} parent=1 // pred_check_branch
      %433 = sbr.rel (0) target = $region81
    $region80: #{tpu_custom_call.1} parent=1 // pred_region
      %434 = dma.done [#allocation13], 128
    $region81: #{tpu_custom_call.1} parent=1 // pred_fallthru
      _
    %435 = vsyncpa [#allocation4], 1
    %436 = vsyncpa [#allocation7], 1
    %437 = vsyncpa [#allocation10], 1
    %438 = vsyncpa [#allocation5], 1
    %439 = vsyncpa [#allocation13], 1

</llo_original>
